<compile_context>
chip_gen: v6e
topology: v6e:2x2x1
jax: 0.10.0
libtpu: 0.0.40
codegen_flags: <defaults>
</compile_context>

<pallas_src>
import math
import jax
import jax.numpy as jnp
from jax.experimental import pallas as pl
from jax.experimental.pallas import tpu as pltpu


# ---------------------------------------------------------------------------
# pe table construction (plain JAX; it is a constant buffer, not a parameter)
# ---------------------------------------------------------------------------
def build_pe(channel: int, joint_num: int, time_len: int, domain: str) -> jnp.ndarray:
    """Deterministic pe buffer, shape (1, channel, time_len, joint_num), float32."""
    if channel % 2 != 0:
        raise ValueError(f"Channel must be an even number. Got {channel}")
    if domain == "temporal":
        pos = jnp.repeat(jnp.arange(time_len, dtype=jnp.float32), joint_num)
    elif domain == "spatial":
        pos = jnp.tile(jnp.arange(joint_num, dtype=jnp.float32), time_len)
    else:
        raise ValueError(f"Unknown domain {domain}")
    position = pos[:, None]                                        # (T*J, 1)
    div_term = jnp.exp(
        jnp.arange(0, channel, 2, dtype=jnp.float32) * -(math.log(10000.0) / channel)
    )                                                              # (C//2,)
    angles = position * div_term                                   # (T*J, C//2)
    pe = jnp.zeros((time_len * joint_num, channel), dtype=jnp.float32)
    pe = pe.at[:, 0::2].set(jnp.sin(angles))
    pe = pe.at[:, 1::2].set(jnp.cos(angles))
    # (T*J, C) -> (T, J, C) -> (C, T, J) -> (1, C, T, J)
    return pe.reshape(time_len, joint_num, channel).transpose(2, 0, 1)[None]


def prepare_pe(pe: jnp.ndarray, t: int, dtype) -> jnp.ndarray:
    """Slice to the first `t` time steps, cast to the activation dtype and flatten.

    Do this ONCE per sequence length and reuse the result; it removes the
    per-call HBM->HBM slice copy and any f32->bf16 promotion inside the kernel.
    Returns shape (1, C*t*J).
    """
    _, c, time_len, j = pe.shape
    if t > time_len:
        raise ValueError(f"Input time dim {t} exceeds pe time_len {time_len}")
    return pe[:, :, :t, :].astype(dtype).reshape(1, c * t * j)


# ---------------------------------------------------------------------------
# Tile-size heuristics (lane-dense, VMEM-budgeted)
# ---------------------------------------------------------------------------
_LANE_TILE_TARGET_BYTES = 1 * 1024 * 1024   # per-row lane tile target
_BLOCK_BUDGET_BYTES = 8 * 1024 * 1024       # per x/out block; 2x-buffered => ~32 MiB + pe
_VMEM_LIMIT_BYTES = 48 * 1024 * 1024        # fits v7x (64 MiB physical), lifts v5e default


def _lane_tile(l: int, itemsize: int) -> int:
    """Largest multiple-of-128 divisor of l under the lane-byte target (else full l)."""
    max_elems = max(128, _LANE_TILE_TARGET_BYTES // itemsize)
    if l <= max_elems:
        return l
    if l % 128 != 0:
        return l  # fallback: full-extent last dim (always legal)
    best = 128
    cand = 128
    while cand <= max_elems:
        if l % cand == 0:
            best = cand
        cand += 128
    return best


def _batch_tile(n: int, lb: int, itemsize: int) -> int:
    """How many batch rows per block: multiple of 8 dividing n (or full n)."""
    rows = max(1, _BLOCK_BUDGET_BYTES // (lb * itemsize))
    if rows >= n:
        return n
    best = 0
    cand = 8
    while cand <= rows:
        if n % cand == 0:
            best = cand
        cand += 8
    return best if best > 0 else n


# ---------------------------------------------------------------------------
# Pallas kernel
# ---------------------------------------------------------------------------
def _pe_add_kernel(x_ref, pe_ref, o_ref):
    # x_ref/o_ref block: (nb, lb); pe_ref block: (1, lb) -> sublane broadcast add.
    o_ref[...] = x_ref[...] + pe_ref[...]


def positional_encoding_forward(x: jnp.ndarray, pe_flat: jnp.ndarray) -> jnp.ndarray:
    """x: (N, C, T, J); pe_flat: (1, C*T*J) from prepare_pe (same dtype as x)."""
    n, c, t, j = x.shape
    l = c * t * j
    if pe_flat.shape != (1, l):
        raise ValueError(f"pe_flat shape {pe_flat.shape} does not match (1, {l})")

    x2 = x.reshape(n, l)                        # lane-dense 2-D view (pure metadata)
    itemsize = jnp.dtype(x.dtype).itemsize
    lb = _lane_tile(l, itemsize)
    nb = _batch_tile(n, lb, itemsize)
    grid = (l // lb, n // nb)                   # outer: feature tile, inner: batch tile
    # pe's block index depends only on the OUTER axis -> fetched once per feature
    # tile and kept resident across all inner batch steps.

    out = pl.pallas_call(
        _pe_add_kernel,
        out_shape=jax.ShapeDtypeStruct((n, l), x.dtype),
        grid_spec=pltpu.PrefetchScalarGridSpec(
            num_scalar_prefetch=0,
            grid=grid,
            in_specs=[
                pl.BlockSpec((nb, lb), lambda li, ni: (ni, li)),
                pl.BlockSpec((1, lb), lambda li, ni: (0, li)),
            ],
            out_specs=pl.BlockSpec((nb, lb), lambda li, ni: (ni, li)),
        ),
        compiler_params=pltpu.CompilerParams(
            dimension_semantics=("parallel", "parallel"),
            vmem_limit_bytes=_VMEM_LIMIT_BYTES,
        ),
    )(x2, pe_flat)
    return out.reshape(n, c, t, j)


# ---------------------------------------------------------------------------
# Demo / correctness check
# ---------------------------------------------------------------------------
if __name__ == "__main__":
    # Small shapes consistent with the module: channel=4 (even), joint_num=16,
    # time_len=32, batch=2; input T=16 < time_len exercises the pe slice.
    # C*T*J = 4*16*16 = 1024 -> lane-dense (multiple of 128).
    batch, channel, joint_num, time_len = 2, 4, 16, 32
    t_in = 16
    domain = "temporal"

    pe = build_pe(channel, joint_num, time_len, domain)            # (1, 4, 32, 16)

    key = jax.random.PRNGKey(0)
    x = jax.random.normal(key, (batch, channel, t_in, joint_num), dtype=jnp.float32)

    # Prepare (slice + cast + flatten) pe once; reuse across calls.
    pe_flat = prepare_pe(pe, t_in, x.dtype)                        # (1, 1024)

    out = positional_encoding_forward(x, pe_flat)
    out = jax.block_until_ready(out)

    # Reference (same math as the torch forward).
    ref = x + pe[:, :, :t_in, :].astype(x.dtype)
    assert out.shape == x.shape
    assert jnp.allclose(out, ref, atol=1e-6), "mismatch vs reference"

    print("KERNEL_OK")
</pallas_src>

<mosaic_0001>
module attributes {stable_mosaic.version = 11 : i64} {
  func.func @_pe_add_kernel(%arg0: i32, %arg1: i32, %arg2: memref<2x1024xf32, #tpu.memory_space<vmem>>, %arg3: memref<1x1024xf32, #tpu.memory_space<vmem>>, %arg4: memref<2x1024xf32, #tpu.memory_space<vmem>>) attributes {dimension_semantics = [#tpu.dimension_semantics<parallel>, #tpu.dimension_semantics<parallel>], iteration_bounds = array<i64: 1, 1>, scalar_prefetch = 0 : i64, scratch_operands = 0 : i64, tpu.core_type = #tpu.core_type<tc>, window_params = [{transform_indices = @transform_0, window_bounds = array<i64: 2, 1024>}, {transform_indices = @transform_1, window_bounds = array<i64: 1, 1024>}, {transform_indices = @transform_2, window_bounds = array<i64: 2, 1024>}]} {
    %c0 = arith.constant 0 : index
    %c0_0 = arith.constant 0 : index
    %0 = vector.load %arg2[%c0, %c0_0] : memref<2x1024xf32, #tpu.memory_space<vmem>>, vector<2x1024xf32>
    %c0_1 = arith.constant 0 : index
    %c0_2 = arith.constant 0 : index
    %1 = vector.load %arg3[%c0_1, %c0_2] : memref<1x1024xf32, #tpu.memory_space<vmem>>, vector<1x1024xf32>
    %2 = vector.broadcast %1 : vector<1x1024xf32> to vector<2x1024xf32>
    %3 = arith.addf %0, %2 : vector<2x1024xf32>
    %c0_3 = arith.constant 0 : index
    %c0_4 = arith.constant 0 : index
    %4 = vector.load %arg4[%c0_3, %c0_4] : memref<2x1024xf32, #tpu.memory_space<vmem>>, vector<2x1024xf32>
    tpu.vector_store %arg4[%c0_3, %c0_4], %3 {strides = array<i32>} : memref<2x1024xf32, #tpu.memory_space<vmem>>, vector<2x1024xf32>,
    return
  }
  func.func @transform_0(%arg0: i32, %arg1: i32) -> (i32, i32) {
    %c0_i32 = arith.constant 0 : i32
    return %arg1, %arg0 : i32, i32
  }
  func.func @transform_1(%arg0: i32, %arg1: i32) -> (i32, i32) {
    %c0_i32 = arith.constant 0 : i32
    %c0_i32_0 = arith.constant 0 : i32
    return %c0_i32, %arg0 : i32, i32
  }
  func.func @transform_2(%arg0: i32, %arg1: i32) -> (i32, i32) {
    %c0_i32 = arith.constant 0 : i32
    return %arg1, %arg0 : i32, i32
  }
}

</mosaic_0001>

<llo_original>
// kernel: tpu_custom_call.1
$region0: #{tpu_custom_call.1}
  #allocation0 [shape = 'u32[]', space=smem, size = 0x4, offset = 0x4, fixed_abs, tag = 'smem constant byte address 0x4 - core index']
  #allocation1 [shape = 'u32[144,128]{1,0:T(1,128)}', space=vmem, size = 0x12000, scoped, tag = 'internal scratch']
  %s0 = inlined_call_operand.hbm [shape: f32[2,1024], index: 0, kind: input, shape index: {}]
  %s1 = inlined_call_operand.hbm [shape: f32[1,1024], index: 1, kind: input, shape index: {}]
  %s2 = inlined_call_operand.hbm [shape: f32[2,1024], index: 2, kind: output, shape index: {}]
  %s3 = sld [smem:[#allocation0]]
  $region26: #{tpu_custom_call.1} parent=0
    _
  %s5 = ssub.s32 1, %s3
  %s6 = scalar_select 0, %s5, %s3
  $region1: #{tpu_custom_call.1} parent=0
    #allocation2 [shape = 'u8[8192]{0}', space=vmem, size = 0x2000, scoped, tag = 'input window, operand 0, single buffered']
    #allocation3 [shape = 's32[1]{0}', space=sflag, size = 0x4, scoped, tag = 'scoped memory for tpu_custom_call.1']
    #allocation4 [shape = 's32[1]{0}', space=sflag, size = 0x4, scoped, tag = 'scoped memory for tpu_custom_call.1']
    #allocation5 [shape = 'u8[4096]{0}', space=vmem, size = 0x1000, scoped, tag = 'input window, operand 1, single buffered']
    #allocation6 [shape = 's32[1]{0}', space=sflag, size = 0x4, scoped, tag = 'scoped memory for tpu_custom_call.1']
    #allocation7 [shape = 'u8[8192]{0}', space=vmem, size = 0x2000, scoped, tag = 'output window, operand 0, single buffered']
    %7 = vsyncpa [#allocation3], 0
    %8 = vsyncpa [#allocation6], 0
    %9 = vsyncpa [#allocation4], 0
    // Predicated region
    $region2: #{tpu_custom_call.1} parent=1 // pred_check
      _
    $region3: #{tpu_custom_call.1} parent=1 // pred_check_branch
      %11 = sbr.rel (0) target = $region5
    $region4: #{tpu_custom_call.1} parent=1 // pred_region
      %s13 = ssub.s32 256, 256
      %14 = vsyncadd [#allocation3], %s13
      %s16 = sshll.u32 [#allocation2], 4
      %s17 = int_to_ptr.vmem [resolvable:$true] %s16
      %19 = dma.hbm_to_vmem [thread:$0]  %s0, 256, %s17, [#allocation3]
    $region5: #{tpu_custom_call.1} parent=1 // pred_fallthru
      _
    // Predicated region
    $region6: #{tpu_custom_call.1} parent=1 // pred_check
      _
    $region7: #{tpu_custom_call.1} parent=1 // pred_check_branch
      %21 = sbr.rel (0) target = $region9
    $region8: #{tpu_custom_call.1} parent=1 // pred_region
      %s23 = ssub.s32 128, 128
      %24 = vsyncadd [#allocation6], %s23
      %s26 = sshll.u32 [#allocation5], 4
      %s27 = int_to_ptr.vmem [resolvable:$true] %s26
      %29 = dma.hbm_to_vmem [thread:$0]  %s1, 128, %s27, [#allocation6]
    $region9: #{tpu_custom_call.1} parent=1 // pred_fallthru
      _
    // Predicated region
    $region10: #{tpu_custom_call.1} parent=1 // pred_check
      _
    $region11: #{tpu_custom_call.1} parent=1 // pred_check_branch
      %31 = sbr.rel (0) target = $region13
    $region12: #{tpu_custom_call.1} parent=1 // pred_region
      %32 = dma.done [#allocation3], 256
    $region13: #{tpu_custom_call.1} parent=1 // pred_fallthru
      _
    // Predicated region
    $region14: #{tpu_custom_call.1} parent=1 // pred_check
      _
    $region15: #{tpu_custom_call.1} parent=1 // pred_check_branch
      %34 = sbr.rel (0) target = $region17
    $region16: #{tpu_custom_call.1} parent=1 // pred_region
      %35 = dma.done [#allocation6], 128
    $region17: #{tpu_custom_call.1} parent=1 // pred_fallthru
      _
    %v36 = vld [vmem:[#allocation2] sm:$0xff]
    %v37 = vld [vmem:[#allocation2 + $0x8] sm:$0xff]
    %v38 = vld [vmem:[#allocation5] sm:$0xff]
    %v40 = vlaneseq
    %v41 = vshrl.u32 %v40, 7
    %v42 = vsub.s32 0, %v41
    %v43 = vrot.slane %v38, %v42
    %v44 = vlaneseq
    %v45 = vshrl.u32 %v44, 7
    %v46 = vsub.s32 1, %v45
    %v47 = vrot.slane %v38, %v46
    %v48 = vlaneseq
    %v49 = vshrl.u32 %v48, 7
    %v50 = vsub.s32 2, %v49
    %v51 = vrot.slane %v38, %v50
    %v52 = vlaneseq
    %v53 = vshrl.u32 %v52, 7
    %v54 = vsub.s32 3, %v53
    %v55 = vrot.slane %v38, %v54
    %v56 = vlaneseq
    %v57 = vshrl.u32 %v56, 7
    %v58 = vsub.s32 4, %v57
    %v59 = vrot.slane %v38, %v58
    %v60 = vlaneseq
    %v61 = vshrl.u32 %v60, 7
    %v62 = vsub.s32 5, %v61
    %v63 = vrot.slane %v38, %v62
    %v64 = vlaneseq
    %v65 = vshrl.u32 %v64, 7
    %v66 = vsub.s32 6, %v65
    %v67 = vrot.slane %v38, %v66
    %v68 = vlaneseq
    %v69 = vshrl.u32 %v68, 7
    %v70 = vsub.s32 7, %v69
    %v71 = vrot.slane %v38, %v70
    %v72 = vcombine.low %v43, %v47
    %v73 = vcombine.low %v51, %v55
    %v75 = vunpack.c.l.s4 1983009808
    %v76 = vunpack.c.0.s8 %v75
    %v77 = vlaneseq
    %v78 = vshrl.u32 %v77, 7
    %v79 = vsub.s32 %v76, %v78
    %v80 = vrot.slane %v72, %v79
    %v82 = vunpack.c.l.s4 1983009808
    %v83 = vunpack.c.0.s8 %v82
    %v84 = vlaneseq
    %v85 = vshrl.u32 %v84, 7
    %v86 = vsub.s32 %v83, %v85
    %v87 = vrot.slane %v73, %v86
    %v88 = vcombine.low %v80, %v87
    %v89 = vcombine.low %v59, %v63
    %v90 = vcombine.low %v67, %v71
    %v92 = vunpack.c.l.s4 1983009808
    %v93 = vunpack.c.0.s8 %v92
    %v94 = vlaneseq
    %v95 = vshrl.u32 %v94, 7
    %v96 = vsub.s32 %v93, %v95
    %v97 = vrot.slane %v89, %v96
    %v99 = vunpack.c.l.s4 1983009808
    %v100 = vunpack.c.0.s8 %v99
    %v101 = vlaneseq
    %v102 = vshrl.u32 %v101, 7
    %v103 = vsub.s32 %v100, %v102
    %v104 = vrot.slane %v90, %v103
    %v105 = vcombine.low %v97, %v104
    %v108 = vadd.f32 %v36, %v88
    %v109 = vadd.f32 %v37, %v105
    %110 = vst [vmem:[#allocation7] sm:$0xff] %v108
    %111 = vst [vmem:[#allocation7 + $0x8] sm:$0xff] %v109
    // Predicated region
    $region18: #{tpu_custom_call.1} parent=1 // pred_check
      _
    $region19: #{tpu_custom_call.1} parent=1 // pred_check_branch
      %113 = sbr.rel (0) target = $region21
    $region20: #{tpu_custom_call.1} parent=1 // pred_region
      %s115 = ssub.s32 256, 256
      %116 = vsyncadd [#allocation4], %s115
      %s118 = sshll.u32 [#allocation7], 4
      %s119 = int_to_ptr.vmem [resolvable:$true] %s118
      %121 = dma.vmem_to_hbm [thread:$0]  %s119, 256, %s2, [#allocation4]
    $region21: #{tpu_custom_call.1} parent=1 // pred_fallthru
      _
    // Predicated region
    $region22: #{tpu_custom_call.1} parent=1 // pred_check
      _
    $region23: #{tpu_custom_call.1} parent=1 // pred_check_branch
      %123 = sbr.rel (0) target = $region25
    $region24: #{tpu_custom_call.1} parent=1 // pred_region
      %124 = dma.done [#allocation4], 256
    $region25: #{tpu_custom_call.1} parent=1 // pred_fallthru
      _
    %125 = vsyncpa [#allocation3], 1
    %126 = vsyncpa [#allocation6], 1
    %127 = vsyncpa [#allocation4], 1

</llo_original>
